<compile_context>
chip_gen: v5e
topology: v5e:2x2
jax: 0.10.0
libtpu: 0.0.40
codegen_flags: <defaults>
</compile_context>

<pallas_src>
import math

import jax
import jax.numpy as jnp
from jax.experimental import pallas as pl
from jax.experimental.pallas import tpu as pltpu


def qcritic_kernel(obs_ref, act_ref,
                   w1o_ref, w1a_ref, b1_ref,
                   w2_ref, b2_ref,
                   wo_ref, bo_ref,
                   out_ref):
    # Layer 1: two small dots (obs / action halves of W1) instead of a
    # lane-axis concat of 12-wide and 4-wide tiles.
    h1 = jnp.tanh(
        jnp.dot(obs_ref[...], w1o_ref[...], preferred_element_type=jnp.float32)
        + jnp.dot(act_ref[...], w1a_ref[...], preferred_element_type=jnp.float32)
        + b1_ref[...]
    )
    # Layer 2.
    h2 = jnp.tanh(
        jnp.dot(h1, w2_ref[...], preferred_element_type=jnp.float32) + b2_ref[...]
    )
    # Output layer (hidden -> 1): VPU multiply + lane reduce; avoids feeding a
    # 1-column matmul through the MXU.
    out_ref[...] = (
        jnp.sum(h2 * wo_ref[...], axis=-1, keepdims=True) + bo_ref[...]
    )


def make_params(key, dim_obs, dim_action, dims_hidden=(64, 64)):
    """Xavier-uniform weights (matching torch.nn.init.xavier_uniform_), zero biases."""
    n_neurons = (dim_obs + dim_action,) + tuple(dims_hidden) + (1,)
    keys = jax.random.split(key, len(n_neurons) - 1)
    params = []
    for k, d_in, d_out in zip(keys, n_neurons[:-1], n_neurons[1:]):
        limit = math.sqrt(6.0 / (d_in + d_out))
        w = jax.random.uniform(k, (d_in, d_out), jnp.float32, -limit, limit)
        b = jnp.zeros((1, d_out), jnp.float32)
        params += [w, b]
    return params


def qcritic_forward(obs, action, params, *, block_batch=512):
    """Fused Pallas forward. Batch is tiled over the grid; weights stay resident."""
    w1, b1, w2, b2, wo, bo = params
    batch, dim_obs = obs.shape
    dim_action = action.shape[1]

    # Static (wrapper-side) split of W1 — avoids an in-kernel non-8-aligned
    # sublane slice or lane-axis concat.
    w1_obs = w1[:dim_obs]
    w1_act = w1[dim_obs:]
    # Output weight as a (1, hidden) row for the mul+reduce formulation.
    wo_row = wo.reshape(1, -1)

    # Batch tile: big enough to amortize per-step overhead, trivially within
    # VMEM budget on v5e/v6e (128 MiB) and v7x (64 MiB) at these feature widths.
    bm = min(block_batch, batch)
    grid = (pl.cdiv(batch, bm),)

    def resident(a):
        # Whole array as one block, same block every grid step -> stays in VMEM.
        return pl.BlockSpec(a.shape, lambda i: (0,) * a.ndim)

    in_specs = [
        pl.BlockSpec((bm, dim_obs), lambda i: (i, 0)),
        pl.BlockSpec((bm, dim_action), lambda i: (i, 0)),
        resident(w1_obs), resident(w1_act), resident(b1),
        resident(w2), resident(b2),
        resident(wo_row), resident(bo),
    ]
    out_spec = pl.BlockSpec((bm, 1), lambda i: (i, 0))

    return pl.pallas_call(
        qcritic_kernel,
        out_shape=jax.ShapeDtypeStruct((batch, 1), jnp.float32),
        grid=grid,
        in_specs=in_specs,
        out_specs=out_spec,
        compiler_params=pltpu.CompilerParams(
            # Batch tiles are independent -> lets Mosaic shard across the two
            # TensorCores on v7x (no-op on single-TC v5e/v6e).
            dimension_semantics=("parallel",)
        ),
    )(obs, action, w1_obs, w1_act, b1, w2, b2, wo_row, bo)


def qcritic_reference(obs, action, params):
    """Pure-JAX reference matching the PyTorch forward semantics."""
    w1, b1, w2, b2, wo, bo = params
    x = jnp.concatenate([obs, action], axis=1)
    x = jnp.tanh(x @ w1 + b1)
    x = jnp.tanh(x @ w2 + b2)
    return x @ wo + bo


if __name__ == "__main__":
    key = jax.random.PRNGKey(0)
    k_obs, k_act, k_params = jax.random.split(key, 3)

    batch = 256
    dim_obs = 12
    dim_action = 4
    dims_hidden = (64, 64)   # module default

    obs = jax.random.normal(k_obs, (batch, dim_obs), jnp.float32)
    action = jax.random.normal(k_act, (batch, dim_action), jnp.float32)
    params = make_params(k_params, dim_obs, dim_action, dims_hidden)

    out = qcritic_forward(obs, action, params, block_batch=128)  # grid = (2,)
    out = jax.block_until_ready(out)

    ref = qcritic_reference(obs, action, params)
    assert out.shape == (batch, 1)
    assert jnp.allclose(out, ref, atol=1e-5, rtol=1e-5)

    print("KERNEL_OK")
</pallas_src>

<mosaic_0001>
module attributes {stable_mosaic.version = 11 : i64} {
  func.func @qcritic_kernel(%arg0: i32, %arg1: memref<128x12xf32, #tpu.memory_space<vmem>>, %arg2: memref<128x4xf32, #tpu.memory_space<vmem>>, %arg3: memref<12x64xf32, #tpu.memory_space<vmem>>, %arg4: memref<4x64xf32, #tpu.memory_space<vmem>>, %arg5: memref<1x64xf32, #tpu.memory_space<vmem>>, %arg6: memref<64x64xf32, #tpu.memory_space<vmem>>, %arg7: memref<1x64xf32, #tpu.memory_space<vmem>>, %arg8: memref<1x64xf32, #tpu.memory_space<vmem>>, %arg9: memref<1x1xf32, #tpu.memory_space<vmem>>, %arg10: memref<128x1xf32, #tpu.memory_space<vmem>>) attributes {dimension_semantics = [#tpu.dimension_semantics<parallel>], iteration_bounds = array<i64: 2>, scalar_prefetch = 0 : i64, scratch_operands = 0 : i64, tpu.core_type = #tpu.core_type<tc>, window_params = [{transform_indices = @transform_0, window_bounds = array<i64: 128, 12>}, {transform_indices = @transform_1, window_bounds = array<i64: 128, 4>}, {pipeline_mode = #tpu.pipeline_mode<synchronous>, transform_indices = @transform_2, window_bounds = array<i64: 12, 64>}, {pipeline_mode = #tpu.pipeline_mode<synchronous>, transform_indices = @transform_3, window_bounds = array<i64: 4, 64>}, {pipeline_mode = #tpu.pipeline_mode<synchronous>, transform_indices = @transform_4, window_bounds = array<i64: 1, 64>}, {pipeline_mode = #tpu.pipeline_mode<synchronous>, transform_indices = @transform_5, window_bounds = array<i64: 64, 64>}, {pipeline_mode = #tpu.pipeline_mode<synchronous>, transform_indices = @transform_6, window_bounds = array<i64: 1, 64>}, {pipeline_mode = #tpu.pipeline_mode<synchronous>, transform_indices = @transform_7, window_bounds = array<i64: 1, 64>}, {pipeline_mode = #tpu.pipeline_mode<synchronous>, transform_indices = @transform_8, window_bounds = array<i64: 1, 1>}, {transform_indices = @transform_9, window_bounds = array<i64: 128, 1>}]} {
    %c0 = arith.constant 0 : index
    %c0_0 = arith.constant 0 : index
    %0 = vector.load %arg1[%c0, %c0_0] : memref<128x12xf32, #tpu.memory_space<vmem>>, vector<128x12xf32>
    %c0_1 = arith.constant 0 : index
    %c0_2 = arith.constant 0 : index
    %1 = vector.load %arg3[%c0_1, %c0_2] : memref<12x64xf32, #tpu.memory_space<vmem>>, vector<12x64xf32>
    %cst = arith.constant dense<0.000000e+00> : vector<128x64xf32>
    %2 = tpu.matmul %0, %1, %cst {dimension_numbers = #tpu.dot_dimension_numbers<[1], [0], [0], [1], [0, 0, 1, 1], [], []>} : vector<128x12xf32>, vector<12x64xf32>, vector<128x64xf32> -> vector<128x64xf32>
    %c0_3 = arith.constant 0 : index
    %c0_4 = arith.constant 0 : index
    %3 = vector.load %arg2[%c0_3, %c0_4] : memref<128x4xf32, #tpu.memory_space<vmem>>, vector<128x4xf32>
    %c0_5 = arith.constant 0 : index
    %c0_6 = arith.constant 0 : index
    %4 = vector.load %arg4[%c0_5, %c0_6] : memref<4x64xf32, #tpu.memory_space<vmem>>, vector<4x64xf32>
    %cst_7 = arith.constant dense<0.000000e+00> : vector<128x64xf32>
    %5 = tpu.matmul %3, %4, %cst_7 {dimension_numbers = #tpu.dot_dimension_numbers<[1], [0], [0], [1], [0, 0, 1, 1], [], []>} : vector<128x4xf32>, vector<4x64xf32>, vector<128x64xf32> -> vector<128x64xf32>
    %6 = arith.addf %2, %5 : vector<128x64xf32>
    %c0_8 = arith.constant 0 : index
    %c0_9 = arith.constant 0 : index
    %7 = vector.load %arg5[%c0_8, %c0_9] : memref<1x64xf32, #tpu.memory_space<vmem>>, vector<1x64xf32>
    %8 = vector.broadcast %7 : vector<1x64xf32> to vector<128x64xf32>
    %9 = arith.addf %6, %8 : vector<128x64xf32>
    %10 = math.tanh %9 : vector<128x64xf32>
    %c0_10 = arith.constant 0 : index
    %c0_11 = arith.constant 0 : index
    %11 = vector.load %arg6[%c0_10, %c0_11] : memref<64x64xf32, #tpu.memory_space<vmem>>, vector<64x64xf32>
    %cst_12 = arith.constant dense<0.000000e+00> : vector<128x64xf32>
    %12 = tpu.matmul %10, %11, %cst_12 {dimension_numbers = #tpu.dot_dimension_numbers<[1], [0], [0], [1], [0, 0, 1, 1], [], []>} : vector<128x64xf32>, vector<64x64xf32>, vector<128x64xf32> -> vector<128x64xf32>
    %c0_13 = arith.constant 0 : index
    %c0_14 = arith.constant 0 : index
    %13 = vector.load %arg7[%c0_13, %c0_14] : memref<1x64xf32, #tpu.memory_space<vmem>>, vector<1x64xf32>
    %14 = vector.broadcast %13 : vector<1x64xf32> to vector<128x64xf32>
    %15 = arith.addf %12, %14 : vector<128x64xf32>
    %16 = math.tanh %15 : vector<128x64xf32>
    %c0_15 = arith.constant 0 : index
    %c0_16 = arith.constant 0 : index
    %17 = vector.load %arg8[%c0_15, %c0_16] : memref<1x64xf32, #tpu.memory_space<vmem>>, vector<1x64xf32>
    %18 = vector.broadcast %17 : vector<1x64xf32> to vector<128x64xf32>
    %19 = arith.mulf %16, %18 : vector<128x64xf32>
    %cst_17 = arith.constant dense<0.000000e+00> : vector<128xf32>
    %20 = vector.multi_reduction <add>, %19, %cst_17 [1] : vector<128x64xf32> to vector<128xf32>
    %21 = vector.shape_cast %20 : vector<128xf32> to vector<128x1xf32>
    %c0_18 = arith.constant 0 : index
    %c0_19 = arith.constant 0 : index
    %22 = vector.load %arg9[%c0_18, %c0_19] : memref<1x1xf32, #tpu.memory_space<vmem>>, vector<1x1xf32>
    %23 = vector.broadcast %22 : vector<1x1xf32> to vector<128x1xf32>
    %24 = arith.addf %21, %23 : vector<128x1xf32>
    %c0_20 = arith.constant 0 : index
    %c0_21 = arith.constant 0 : index
    %25 = vector.load %arg10[%c0_20, %c0_21] : memref<128x1xf32, #tpu.memory_space<vmem>>, vector<128x1xf32>
    tpu.vector_store %arg10[%c0_20, %c0_21], %24 {strides = array<i32>} : memref<128x1xf32, #tpu.memory_space<vmem>>, vector<128x1xf32>,
    return
  }
  func.func @transform_0(%arg0: i32) -> (i32, i32) {
    %c0_i32 = arith.constant 0 : i32
    %c0_i32_0 = arith.constant 0 : i32
    return %arg0, %c0_i32 : i32, i32
  }
  func.func @transform_1(%arg0: i32) -> (i32, i32) {
    %c0_i32 = arith.constant 0 : i32
    %c0_i32_0 = arith.constant 0 : i32
    return %arg0, %c0_i32 : i32, i32
  }
  func.func @transform_2(%arg0: i32) -> (i32, i32) {
    %c0_i32 = arith.constant 0 : i32
    %c0_i32_0 = arith.constant 0 : i32
    %c0_i32_1 = arith.constant 0 : i32
    return %c0_i32, %c0_i32_0 : i32, i32
  }
  func.func @transform_3(%arg0: i32) -> (i32, i32) {
    %c0_i32 = arith.constant 0 : i32
    %c0_i32_0 = arith.constant 0 : i32
    %c0_i32_1 = arith.constant 0 : i32
    return %c0_i32, %c0_i32_0 : i32, i32
  }
  func.func @transform_4(%arg0: i32) -> (i32, i32) {
    %c0_i32 = arith.constant 0 : i32
    %c0_i32_0 = arith.constant 0 : i32
    %c0_i32_1 = arith.constant 0 : i32
    return %c0_i32, %c0_i32_0 : i32, i32
  }
  func.func @transform_5(%arg0: i32) -> (i32, i32) {
    %c0_i32 = arith.constant 0 : i32
    %c0_i32_0 = arith.constant 0 : i32
    %c0_i32_1 = arith.constant 0 : i32
    return %c0_i32, %c0_i32_0 : i32, i32
  }
  func.func @transform_6(%arg0: i32) -> (i32, i32) {
    %c0_i32 = arith.constant 0 : i32
    %c0_i32_0 = arith.constant 0 : i32
    %c0_i32_1 = arith.constant 0 : i32
    return %c0_i32, %c0_i32_0 : i32, i32
  }
  func.func @transform_7(%arg0: i32) -> (i32, i32) {
    %c0_i32 = arith.constant 0 : i32
    %c0_i32_0 = arith.constant 0 : i32
    %c0_i32_1 = arith.constant 0 : i32
    return %c0_i32, %c0_i32_0 : i32, i32
  }
  func.func @transform_8(%arg0: i32) -> (i32, i32) {
    %c0_i32 = arith.constant 0 : i32
    %c0_i32_0 = arith.constant 0 : i32
    %c0_i32_1 = arith.constant 0 : i32
    return %c0_i32, %c0_i32_0 : i32, i32
  }
  func.func @transform_9(%arg0: i32) -> (i32, i32) {
    %c0_i32 = arith.constant 0 : i32
    %c0_i32_0 = arith.constant 0 : i32
    return %arg0, %c0_i32 : i32, i32
  }
}

</mosaic_0001>

<llo_original>
// kernel: tpu_custom_call.1
$region0: #{tpu_custom_call.1}
  #allocation0 [shape = 'u32[]', space=smem, size = 0x4, offset = 0x4, fixed_abs, tag = 'smem constant byte address 0x4 - core index']
  #allocation1 [shape = 'u32[72,128]{1,0:T(1,128)}', space=vmem, size = 0x9000, scoped, tag = 'internal scratch']
  #allocation2 [shape = 'f32[1,1]{1,0:T(1,128)S(1)}', space=vmem, size = 0x200, scoped, tag = 'scoped memory for tpu_custom_call.1']
  %s0 = inlined_call_operand.vmem [shape: f32[256,12], index: 0, kind: input, shape index: {}]
  %s1 = inlined_call_operand.vmem [shape: f32[256,4], index: 1, kind: input, shape index: {}]
  %s2 = inlined_call_operand.vmem [shape: f32[12,64], index: 2, kind: input, shape index: {}]
  %s3 = inlined_call_operand.vmem [shape: f32[4,64], index: 3, kind: input, shape index: {}]
  %s4 = inlined_call_operand.vmem [shape: f32[1,64], index: 4, kind: input, shape index: {}]
  %s5 = inlined_call_operand.vmem [shape: f32[64,64], index: 5, kind: input, shape index: {}]
  %s6 = inlined_call_operand.vmem [shape: f32[1,64], index: 6, kind: input, shape index: {}]
  %s7 = inlined_call_operand.vmem [shape: f32[1,64], index: 7, kind: input, shape index: {}]
  %s8 = inlined_call_operand.<no memory space> [shape: f32[1,1], index: 8, kind: input, shape index: {}]
  %s9 = inlined_call_operand.vmem [shape: f32[256,1], index: 9, kind: output, shape index: {}]
  %s10 = sld [smem:[#allocation0]]
  $region69: #{tpu_custom_call.1} parent=0
    _
  %s12 = ssub.s32 1, %s10
  %s13 = scalar_select 0, %s12, %s10
  %v14 = vstv %s8
  %15 = vst [vmem:[#allocation2] sm:$0x1] %v14
  loop: start=0, step=1, limit=4
  $region2: #{tpu_custom_call.1} parent=0 // loop_pre_header
    _
  $region3: #{tpu_custom_call.1} parent=0 // loop_header
    %s17 = sphi 0, %s21
    %p18 = scmp.ge.s32.totalorder %s17, 4
    %s27 = sphi 0, %s29
    %s30 = sphi 0, %s27
    %s31 = sphi 0, %s30
    %s47 = sphi 0, %s31
    %s53 = sphi 0, %s55
    %s56 = sphi 0, %s53
    %s57 = sphi 0, %s56
    %s73 = sphi 0, %s57
    %s77 = sphi 0, %s77
    %s79 = sphi 0, %s77
    %s80 = sphi 0, %s79
    %s94 = sphi 0, %s80
    %s98 = sphi 0, %s98
    %s100 = sphi 0, %s98
    %s101 = sphi 0, %s100
    %s115 = sphi 0, %s101
    %s119 = sphi 0, %s119
    %s121 = sphi 0, %s119
    %s122 = sphi 0, %s121
    %s136 = sphi 0, %s122
    %s140 = sphi 0, %s140
    %s142 = sphi 0, %s140
    %s143 = sphi 0, %s142
    %s157 = sphi 0, %s143
    %s161 = sphi 0, %s161
    %s163 = sphi 0, %s161
    %s164 = sphi 0, %s163
    %s178 = sphi 0, %s164
    %s182 = sphi 0, %s182
    %s184 = sphi 0, %s182
    %s185 = sphi 0, %s184
    %s199 = sphi 0, %s185
    %s203 = sphi 0, %s203
    %s205 = sphi 0, %s203
    %s206 = sphi 0, %s205
    %s220 = sphi 0, %s206
    %s226 = sphi 0, %s228
    %s229 = sphi 0, %s226
    %s230 = sphi 0, %s229
    %s246 = sphi 0, %s230
  $region4: #{tpu_custom_call.1} parent=0 // loop_header_branch
    %20 = sbr.rel (%p18) target = $region8
  $region5: #{tpu_custom_call.1} parent=0 // loop_body
    %s22 = ssub.s32 %s17, 1
    %s23 = ssub.s32 %s17, 2
    %s24 = sadd.s32 %s17, 1
    %s25 = ssub.s32 %s17, %s24
    %p26 = scmp.eq.s32.totalorder %s25, 0
    %s28 = sadd.s32 %s27, 1
    %s29 = scalar_select %p26, %s27, %s28
    %p32 = pneg %p26
    %p33 = scmp.eq.s32.totalorder %s17, 1
    %p34 = por %p32, %p33
    %p35 = scmp.ne.s32.totalorder %s27, %s30
    %p36 = scmp.eq.s32.totalorder %s17, 0
    %p37 = por %p35, %p36
    %p38 = scmp.ne.s32.totalorder %s27, %s30
    %p39 = scmp.eq.s32.totalorder %s22, 1
    %p40 = por %p38, %p39
    %p41 = scmp.ne.s32.totalorder %s30, %s31
    %p42 = scmp.eq.s32.totalorder %s22, 0
    %p43 = por %p41, %p42
    %p44 = scmp.ne.s32.totalorder %s30, %s31
    %p45 = scmp.eq.s32.totalorder %s23, 1
    %p46 = por %p44, %p45
    %p48 = scmp.ne.s32.totalorder %s31, %s47
    %p49 = scmp.eq.s32.totalorder %s23, 0
    %p50 = por %p48, %p49
    %s51 = ssub.s32 %s17, %s24
    %p52 = scmp.eq.s32.totalorder %s51, 0
    %s54 = sadd.s32 %s53, 1
    %s55 = scalar_select %p52, %s53, %s54
    %p58 = pneg %p52
    %p59 = scmp.eq.s32.totalorder %s17, 1
    %p60 = por %p58, %p59
    %p61 = scmp.ne.s32.totalorder %s53, %s56
    %p62 = scmp.eq.s32.totalorder %s17, 0
    %p63 = por %p61, %p62
    %p64 = scmp.ne.s32.totalorder %s53, %s56
    %p65 = scmp.eq.s32.totalorder %s22, 1
    %p66 = por %p64, %p65
    %p67 = scmp.ne.s32.totalorder %s56, %s57
    %p68 = scmp.eq.s32.totalorder %s22, 0
    %p69 = por %p67, %p68
    %p70 = scmp.ne.s32.totalorder %s56, %s57
    %p71 = scmp.eq.s32.totalorder %s23, 1
    %p72 = por %p70, %p71
    %p74 = scmp.ne.s32.totalorder %s57, %s73
    %p75 = scmp.eq.s32.totalorder %s23, 0
    %p76 = por %p74, %p75
    %s78 = sadd.s32 %s77, 1
    %p81 = scmp.eq.s32.totalorder %s17, 1
    %p82 = scmp.ne.s32.totalorder %s77, %s79
    %p83 = scmp.eq.s32.totalorder %s17, 0
    %p84 = por %p82, %p83
    %p85 = scmp.ne.s32.totalorder %s77, %s79
    %p86 = scmp.eq.s32.totalorder %s22, 1
    %p87 = por %p85, %p86
    %p88 = scmp.ne.s32.totalorder %s79, %s80
    %p89 = scmp.eq.s32.totalorder %s22, 0
    %p90 = por %p88, %p89
    %p91 = scmp.ne.s32.totalorder %s79, %s80
    %p92 = scmp.eq.s32.totalorder %s23, 1
    %p93 = por %p91, %p92
    %p95 = scmp.ne.s32.totalorder %s80, %s94
    %p96 = scmp.eq.s32.totalorder %s23, 0
    %p97 = por %p95, %p96
    %s99 = sadd.s32 %s98, 1
    %p102 = scmp.eq.s32.totalorder %s17, 1
    %p103 = scmp.ne.s32.totalorder %s98, %s100
    %p104 = scmp.eq.s32.totalorder %s17, 0
    %p105 = por %p103, %p104
    %p106 = scmp.ne.s32.totalorder %s98, %s100
    %p107 = scmp.eq.s32.totalorder %s22, 1
    %p108 = por %p106, %p107
    %p109 = scmp.ne.s32.totalorder %s100, %s101
    %p110 = scmp.eq.s32.totalorder %s22, 0
    %p111 = por %p109, %p110
    %p112 = scmp.ne.s32.totalorder %s100, %s101
    %p113 = scmp.eq.s32.totalorder %s23, 1
    %p114 = por %p112, %p113
    %p116 = scmp.ne.s32.totalorder %s101, %s115
    %p117 = scmp.eq.s32.totalorder %s23, 0
    %p118 = por %p116, %p117
    %s120 = sadd.s32 %s119, 1
    %p123 = scmp.eq.s32.totalorder %s17, 1
    %p124 = scmp.ne.s32.totalorder %s119, %s121
    %p125 = scmp.eq.s32.totalorder %s17, 0
    %p126 = por %p124, %p125
    %p127 = scmp.ne.s32.totalorder %s119, %s121
    %p128 = scmp.eq.s32.totalorder %s22, 1
    %p129 = por %p127, %p128
    %p130 = scmp.ne.s32.totalorder %s121, %s122
    %p131 = scmp.eq.s32.totalorder %s22, 0
    %p132 = por %p130, %p131
    %p133 = scmp.ne.s32.totalorder %s121, %s122
    %p134 = scmp.eq.s32.totalorder %s23, 1
    %p135 = por %p133, %p134
    %p137 = scmp.ne.s32.totalorder %s122, %s136
    %p138 = scmp.eq.s32.totalorder %s23, 0
    %p139 = por %p137, %p138
    %s141 = sadd.s32 %s140, 1
    %p144 = scmp.eq.s32.totalorder %s17, 1
    %p145 = scmp.ne.s32.totalorder %s140, %s142
    %p146 = scmp.eq.s32.totalorder %s17, 0
    %p147 = por %p145, %p146
    %p148 = scmp.ne.s32.totalorder %s140, %s142
    %p149 = scmp.eq.s32.totalorder %s22, 1
    %p150 = por %p148, %p149
    %p151 = scmp.ne.s32.totalorder %s142, %s143
    %p152 = scmp.eq.s32.totalorder %s22, 0
    %p153 = por %p151, %p152
    %p154 = scmp.ne.s32.totalorder %s142, %s143
    %p155 = scmp.eq.s32.totalorder %s23, 1
    %p156 = por %p154, %p155
    %p158 = scmp.ne.s32.totalorder %s143, %s157
    %p159 = scmp.eq.s32.totalorder %s23, 0
    %p160 = por %p158, %p159
    %s162 = sadd.s32 %s161, 1
    %p165 = scmp.eq.s32.totalorder %s17, 1
    %p166 = scmp.ne.s32.totalorder %s161, %s163
    %p167 = scmp.eq.s32.totalorder %s17, 0
    %p168 = por %p166, %p167
    %p169 = scmp.ne.s32.totalorder %s161, %s163
    %p170 = scmp.eq.s32.totalorder %s22, 1
    %p171 = por %p169, %p170
    %p172 = scmp.ne.s32.totalorder %s163, %s164
    %p173 = scmp.eq.s32.totalorder %s22, 0
    %p174 = por %p172, %p173
    %p175 = scmp.ne.s32.totalorder %s163, %s164
    %p176 = scmp.eq.s32.totalorder %s23, 1
    %p177 = por %p175, %p176
    %p179 = scmp.ne.s32.totalorder %s164, %s178
    %p180 = scmp.eq.s32.totalorder %s23, 0
    %p181 = por %p179, %p180
    %s183 = sadd.s32 %s182, 1
    %p186 = scmp.eq.s32.totalorder %s17, 1
    %p187 = scmp.ne.s32.totalorder %s182, %s184
    %p188 = scmp.eq.s32.totalorder %s17, 0
    %p189 = por %p187, %p188
    %p190 = scmp.ne.s32.totalorder %s182, %s184
    %p191 = scmp.eq.s32.totalorder %s22, 1
    %p192 = por %p190, %p191
    %p193 = scmp.ne.s32.totalorder %s184, %s185
    %p194 = scmp.eq.s32.totalorder %s22, 0
    %p195 = por %p193, %p194
    %p196 = scmp.ne.s32.totalorder %s184, %s185
    %p197 = scmp.eq.s32.totalorder %s23, 1
    %p198 = por %p196, %p197
    %p200 = scmp.ne.s32.totalorder %s185, %s199
    %p201 = scmp.eq.s32.totalorder %s23, 0
    %p202 = por %p200, %p201
    %s204 = sadd.s32 %s203, 1
    %p207 = scmp.eq.s32.totalorder %s17, 1
    %p208 = scmp.ne.s32.totalorder %s203, %s205
    %p209 = scmp.eq.s32.totalorder %s17, 0
    %p210 = por %p208, %p209
    %p211 = scmp.ne.s32.totalorder %s203, %s205
    %p212 = scmp.eq.s32.totalorder %s22, 1
    %p213 = por %p211, %p212
    %p214 = scmp.ne.s32.totalorder %s205, %s206
    %p215 = scmp.eq.s32.totalorder %s22, 0
    %p216 = por %p214, %p215
    %p217 = scmp.ne.s32.totalorder %s205, %s206
    %p218 = scmp.eq.s32.totalorder %s23, 1
    %p219 = por %p217, %p218
    %p221 = scmp.ne.s32.totalorder %s206, %s220
    %p222 = scmp.eq.s32.totalorder %s23, 0
    %p223 = por %p221, %p222
    %s224 = ssub.s32 %s17, %s24
    %p225 = scmp.eq.s32.totalorder %s224, 0
    %s227 = sadd.s32 %s226, 1
    %s228 = scalar_select %p225, %s226, %s227
    %p231 = pneg %p225
    %p232 = scmp.eq.s32.totalorder %s17, 1
    %p233 = por %p231, %p232
    %p234 = scmp.ne.s32.totalorder %s226, %s229
    %p235 = scmp.eq.s32.totalorder %s17, 0
    %p236 = por %p234, %p235
    %p237 = scmp.ne.s32.totalorder %s226, %s229
    %p238 = scmp.eq.s32.totalorder %s22, 1
    %p239 = por %p237, %p238
    %p240 = scmp.ne.s32.totalorder %s229, %s230
    %p241 = scmp.eq.s32.totalorder %s22, 0
    %p242 = por %p240, %p241
    %p243 = scmp.ne.s32.totalorder %s229, %s230
    %p244 = scmp.eq.s32.totalorder %s23, 1
    %p245 = por %p243, %p244
    %p247 = scmp.ne.s32.totalorder %s230, %s246
    %p248 = scmp.eq.s32.totalorder %s23, 0
    %p249 = por %p247, %p248
    %p250 = scmp.le.s32.totalorder 1, %s17
    %p251 = scmp.lt.s32.totalorder %s17, 3
    %p252 = pnand %p250, %p251
    %p253 = pneg %p252
    // Predicated region
    $region9: #{tpu_custom_call.1} parent=5 // pred_check
      _
    $region10: #{tpu_custom_call.1} parent=5 // pred_check_branch
      %255 = sbr.rel (%p252) target = $region12
    $region11: #{tpu_custom_call.1} parent=5 // pred_region
      %s256 = ssub.s32 %s17, 1
      // Predicated region
      $region13: #{tpu_custom_call.1} parent=11 // pred_check
        %p257 = pneg %p90
      $region14: #{tpu_custom_call.1} parent=11 // pred_check_branch
        %259 = sbr.rel (%p257) target = $region16
      $region15: #{tpu_custom_call.1} parent=11 // pred_region
        _
      $region16: #{tpu_custom_call.1} parent=11 // pred_fallthru
        _
      // Predicated region
      $region17: #{tpu_custom_call.1} parent=11 // pred_check
        %p260 = pneg %p111
      $region18: #{tpu_custom_call.1} parent=11 // pred_check_branch
        %262 = sbr.rel (%p260) target = $region20
      $region19: #{tpu_custom_call.1} parent=11 // pred_region
        _
      $region20: #{tpu_custom_call.1} parent=11 // pred_fallthru
        _
      // Predicated region
      $region21: #{tpu_custom_call.1} parent=11 // pred_check
        %p263 = pneg %p132
      $region22: #{tpu_custom_call.1} parent=11 // pred_check_branch
        %265 = sbr.rel (%p263) target = $region24
      $region23: #{tpu_custom_call.1} parent=11 // pred_region
        _
      $region24: #{tpu_custom_call.1} parent=11 // pred_fallthru
        _
      // Predicated region
      $region25: #{tpu_custom_call.1} parent=11 // pred_check
        %p266 = pneg %p153
      $region26: #{tpu_custom_call.1} parent=11 // pred_check_branch
        %268 = sbr.rel (%p266) target = $region28
      $region27: #{tpu_custom_call.1} parent=11 // pred_region
        _
      $region28: #{tpu_custom_call.1} parent=11 // pred_fallthru
        _
      // Predicated region
      $region29: #{tpu_custom_call.1} parent=11 // pred_check
        %p269 = pneg %p174
      $region30: #{tpu_custom_call.1} parent=11 // pred_check_branch
        %271 = sbr.rel (%p269) target = $region32
      $region31: #{tpu_custom_call.1} parent=11 // pred_region
        _
      $region32: #{tpu_custom_call.1} parent=11 // pred_fallthru
        _
      // Predicated region
      $region33: #{tpu_custom_call.1} parent=11 // pred_check
        %p272 = pneg %p195
      $region34: #{tpu_custom_call.1} parent=11 // pred_check_branch
        %274 = sbr.rel (%p272) target = $region36
      $region35: #{tpu_custom_call.1} parent=11 // pred_region
        _
      $region36: #{tpu_custom_call.1} parent=11 // pred_fallthru
        _
      // Predicated region
      $region37: #{tpu_custom_call.1} parent=11 // pred_check
        %p275 = pneg %p216
      $region38: #{tpu_custom_call.1} parent=11 // pred_check_branch
        %277 = sbr.rel (%p275) target = $region40
      $region39: #{tpu_custom_call.1} parent=11 // pred_region
        _
      $region40: #{tpu_custom_call.1} parent=11 // pred_fallthru
        _
    $region12: #{tpu_custom_call.1} parent=5 // pred_fallthru
      _
    %p278 = scmp.lt.s32.totalorder %s17, 2
    // Predicated region
    $region41: #{tpu_custom_call.1} parent=5 // pred_check
      %p279 = pneg %p278
    $region42: #{tpu_custom_call.1} parent=5 // pred_check_branch
      %281 = sbr.rel (%p279) target = $region44
    $region43: #{tpu_custom_call.1} parent=5 // pred_region
      // Predicated region
      $region45: #{tpu_custom_call.1} parent=43 // pred_check
        %p282 = pneg %p37
      $region46: #{tpu_custom_call.1} parent=43 // pred_check_branch
        %284 = sbr.rel (%p282) target = $region48
      $region47: #{tpu_custom_call.1} parent=43 // pred_region
        %s285 = smul.u32 16, %s17
        %p286 = scmp.lt.s32.totalorder %s285, 31
        %s287 = scalar_select %p286, %s285, 31
        %s288 = smul.addr %s287, 8
        %s289 = scalar_lea.vmem %s0, %s288
        %s290 = smul.u32 16, %s17
      $region48: #{tpu_custom_call.1} parent=43 // pred_fallthru
        _
      // Predicated region
      $region49: #{tpu_custom_call.1} parent=43 // pred_check
        %p291 = pneg %p63
      $region50: #{tpu_custom_call.1} parent=43 // pred_check_branch
        %293 = sbr.rel (%p291) target = $region52
      $region51: #{tpu_custom_call.1} parent=43 // pred_region
        %s294 = smul.u32 16, %s17
        %p295 = scmp.lt.s32.totalorder %s294, 31
        %s296 = scalar_select %p295, %s294, 31
        %s297 = smul.addr %s296, 8
        %s298 = scalar_lea.vmem %s1, %s297
        %s299 = smul.u32 16, %s17
      $region52: #{tpu_custom_call.1} parent=43 // pred_fallthru
        _
    $region44: #{tpu_custom_call.1} parent=5 // pred_fallthru
      _
    %p300 = scmp.le.s32.totalorder 1, %s17
    %p301 = scmp.lt.s32.totalorder %s17, 3
    %p302 = pnand %p300, %p301
    %p303 = pneg %p302
    // Predicated region
    $region53: #{tpu_custom_call.1} parent=5 // pred_check
      _
    $region54: #{tpu_custom_call.1} parent=5 // pred_check_branch
      %305 = sbr.rel (%p302) target = $region56
    $region55: #{tpu_custom_call.1} parent=5 // pred_region
      %s306 = ssub.s32 %s17, 1
      %s307 = smul.u32 16, %s22
      %p308 = scmp.lt.s32.totalorder %s307, 31
      %s309 = scalar_select %p308, %s307, 31
      %s310 = smul.addr %s309, 8
      %s311 = scalar_lea.vmem %s0, %s310
      %p312 = pneg %p43
      %p313 = pneg %p40
      %s314 = smul.u32 16, %s22
      %p315 = scmp.lt.s32.totalorder %s314, 31
      %s316 = scalar_select %p315, %s314, 31
      %s317 = smul.addr %s316, 8
      %s318 = scalar_lea.vmem %s1, %s317
      %p319 = pneg %p69
      %p320 = pneg %p66
      %p321 = pneg %p90
      %p322 = pneg %p87
      %p323 = pneg %p111
      %p324 = pneg %p108
      %p325 = pneg %p132
      %p326 = pneg %p129
      %p327 = pneg %p153
      %p328 = pneg %p150
      %p329 = pneg %p174
      %p330 = pneg %p171
      %p331 = pneg %p195
      %p332 = pneg %p192
      %p333 = pneg %p216
      %p334 = pneg %p213
      %p335 = pneg %p242
      %p336 = pneg %p239
      %s337 = smul.u32 16, %s22
      %p338 = scmp.lt.s32.totalorder %s337, 31
      %s339 = scalar_select %p338, %s337, 31
      %s340 = smul.addr %s339, 8
      %s341 = scalar_lea.vmem %s9, %s340
      %s342 = smul.u32 16, %s22
      %p343 = scmp.lt.s32.totalorder %s342, 31
      %s344 = scalar_select %p343, %s342, 31
      %s345 = smul.addr %s344, 8
      %s346 = scalar_lea.vmem %s0, %s345
      %s347 = smul.u32 16, %s22
      %s348 = smul.u32 16, %s22
      %p349 = scmp.lt.s32.totalorder %s348, 31
      %s350 = scalar_select %p349, %s348, 31
      %s351 = smul.addr %s350, 8
      %s352 = scalar_lea.vmem %s1, %s351
      %s353 = smul.u32 16, %s22
      %s354 = smul.u32 16, %s22
      %p355 = scmp.lt.s32.totalorder %s354, 31
      %s356 = scalar_select %p355, %s354, 31
      %s357 = smul.addr %s356, 8
      %s358 = scalar_lea.vmem %s9, %s357
      %s359 = smul.u32 16, %s22
      %v360 = vld [vmem:[%s346] sm:$0xff]
      %v361 = vld [vmem:[%s346 + $0x8] sm:$0xff]
      %v362 = vld [vmem:[%s346 + $0x10] sm:$0xff]
      %v363 = vld [vmem:[%s346 + $0x18] sm:$0xff]
      %v364 = vld [vmem:[%s346 + $0x20] sm:$0xff]
      %v365 = vld [vmem:[%s346 + $0x28] sm:$0xff]
      %v366 = vld [vmem:[%s346 + $0x30] sm:$0xff]
      %v367 = vld [vmem:[%s346 + $0x38] sm:$0xff]
      %v368 = vld [vmem:[%s346 + $0x40] sm:$0xff]
      %v369 = vld [vmem:[%s346 + $0x48] sm:$0xff]
      %v370 = vld [vmem:[%s346 + $0x50] sm:$0xff]
      %v371 = vld [vmem:[%s346 + $0x58] sm:$0xff]
      %v372 = vld [vmem:[%s346 + $0x60] sm:$0xff]
      %v373 = vld [vmem:[%s346 + $0x68] sm:$0xff]
      %v374 = vld [vmem:[%s346 + $0x70] sm:$0xff]
      %v375 = vld [vmem:[%s346 + $0x78] sm:$0xff]
      %v376 = vld [vmem:[%s2] sm:$0xff]
      %v377 = vld [vmem:[%s2 + $0x8] sm:$0xf]
      %v378 = vld [vmem:[%s352] sm:$0xff]
      %v379 = vld [vmem:[%s352 + $0x8] sm:$0xff]
      %v380 = vld [vmem:[%s352 + $0x10] sm:$0xff]
      %v381 = vld [vmem:[%s352 + $0x18] sm:$0xff]
      %v382 = vld [vmem:[%s352 + $0x20] sm:$0xff]
      %v383 = vld [vmem:[%s352 + $0x28] sm:$0xff]
      %v384 = vld [vmem:[%s352 + $0x30] sm:$0xff]
      %v385 = vld [vmem:[%s352 + $0x38] sm:$0xff]
      %v386 = vld [vmem:[%s352 + $0x40] sm:$0xff]
      %v387 = vld [vmem:[%s352 + $0x48] sm:$0xff]
      %v388 = vld [vmem:[%s352 + $0x50] sm:$0xff]
      %v389 = vld [vmem:[%s352 + $0x58] sm:$0xff]
      %v390 = vld [vmem:[%s352 + $0x60] sm:$0xff]
      %v391 = vld [vmem:[%s352 + $0x68] sm:$0xff]
      %v392 = vld [vmem:[%s352 + $0x70] sm:$0xff]
      %v393 = vld [vmem:[%s352 + $0x78] sm:$0xff]
      %v394 = vld [vmem:[%s3] sm:$0xf]
      %vm395 = vcmask 31744
      %v397 = vsel %vm395, %v378, 0
      %v400 = vsel %vm395, %v379, 0
      %v403 = vsel %vm395, %v380, 0
      %v406 = vsel %vm395, %v381, 0
      %v409 = vsel %vm395, %v382, 0
      %v412 = vsel %vm395, %v383, 0
      %v415 = vsel %vm395, %v384, 0
      %v418 = vsel %vm395, %v385, 0
      %v421 = vsel %vm395, %v386, 0
      %v424 = vsel %vm395, %v387, 0
      %v427 = vsel %vm395, %v388, 0
      %v430 = vsel %vm395, %v389, 0
      %v433 = vsel %vm395, %v390, 0
      %v436 = vsel %vm395, %v391, 0
      %v439 = vsel %vm395, %v392, 0
      %v442 = vsel %vm395, %v393, 0
      %vm444 = vcmask 1043456
      %v446 = vsel %vm444, %v394, 0
      %448 = vmatpush.msra.mxu0 0.0
      %449 = vmatpush.msra.mxu0 0.0
      %450 = vmatpush.msra.mxu0 0.0
      %451 = vmatpush.msra.mxu0 0.0
      %452 = vmatpush.msra.mxu0 0.0
      %453 = vmatpush.msra.mxu0 0.0
      %454 = vmatpush.msra.mxu0 0.0
      %455 = vmatpush.msra.mxu0 0.0
      %456 = vmatpush.msra.mxu0 0.0
      %457 = vmatpush.msra.mxu0 0.0
      %458 = vmatpush.msra.mxu0 0.0
      %459 = vmatpush.msra.mxu0 0.0
      %460 = vmatpush.msra.mxu0 0.0
      %461 = vmatpush.msra.mxu0 0.0
      %462 = vmatpush.msra.mxu0 0.0
      %463 = vmatpush.msra.mxu0 %v446
      %464 = vmatmul.f32.gmra.mxu0 %v397
      %v465 = vpop.f32.mrf.mxu0
      %v466 = vadd.f32 0.0, %v465
      %467 = vmatmul.f32.gmra.mxu0 %v400
      %v468 = vpop.f32.mrf.mxu0
      %v469 = vadd.f32 0.0, %v468
      %470 = vmatmul.f32.gmra.mxu0 %v403
      %v471 = vpop.f32.mrf.mxu0
      %v472 = vadd.f32 0.0, %v471
      %473 = vmatmul.f32.gmra.mxu0 %v406
      %v474 = vpop.f32.mrf.mxu0
      %v475 = vadd.f32 0.0, %v474
      %476 = vmatmul.f32.gmra.mxu0 %v409
      %v477 = vpop.f32.mrf.mxu0
      %v478 = vadd.f32 0.0, %v477
      %479 = vmatmul.f32.gmra.mxu0 %v412
      %v480 = vpop.f32.mrf.mxu0
      %v481 = vadd.f32 0.0, %v480
      %482 = vmatmul.f32.gmra.mxu0 %v415
      %v483 = vpop.f32.mrf.mxu0
      %v484 = vadd.f32 0.0, %v483
      %485 = vmatmul.f32.gmra.mxu0 %v418
      %v486 = vpop.f32.mrf.mxu0
      %v487 = vadd.f32 0.0, %v486
      %488 = vmatmul.f32.gmra.mxu0 %v421
      %v489 = vpop.f32.mrf.mxu0
      %v490 = vadd.f32 0.0, %v489
      %491 = vmatmul.f32.gmra.mxu0 %v424
      %v492 = vpop.f32.mrf.mxu0
      %v493 = vadd.f32 0.0, %v492
      %494 = vmatmul.f32.gmra.mxu0 %v427
      %v495 = vpop.f32.mrf.mxu0
      %v496 = vadd.f32 0.0, %v495
      %497 = vmatmul.f32.gmra.mxu0 %v430
      %v498 = vpop.f32.mrf.mxu0
      %v499 = vadd.f32 0.0, %v498
      %500 = vmatmul.f32.gmra.mxu0 %v433
      %v501 = vpop.f32.mrf.mxu0
      %v502 = vadd.f32 0.0, %v501
      %503 = vmatmul.f32.gmra.mxu0 %v436
      %v504 = vpop.f32.mrf.mxu0
      %v505 = vadd.f32 0.0, %v504
      %506 = vmatmul.f32.gmra.mxu0 %v439
      %v507 = vpop.f32.mrf.mxu0
      %v508 = vadd.f32 0.0, %v507
      %509 = vmatmul.f32.gmra.mxu0 %v442
      %v510 = vpop.f32.mrf.mxu0
      %v511 = vadd.f32 0.0, %v510
      %512 = vdwg.mxu0
      %vm513 = vcmask 97280
      %v515 = vsel %vm513, %v360, 0
      %v518 = vsel %vm513, %v361, 0
      %v521 = vsel %vm513, %v362, 0
      %v524 = vsel %vm513, %v363, 0
      %v527 = vsel %vm513, %v364, 0
      %v530 = vsel %vm513, %v365, 0
      %v533 = vsel %vm513, %v366, 0
      %v536 = vsel %vm513, %v367, 0
      %v539 = vsel %vm513, %v368, 0
      %v542 = vsel %vm513, %v369, 0
      %v545 = vsel %vm513, %v370, 0
      %v548 = vsel %vm513, %v371, 0
      %v551 = vsel %vm513, %v372, 0
      %v554 = vsel %vm513, %v373, 0
      %v557 = vsel %vm513, %v374, 0
      %v560 = vsel %vm513, %v375, 0
      %v563 = vsel %vm444, %v377, 0
      %565 = vmatpush.msra.mxu0 0.0
      %566 = vmatpush.msra.mxu0 0.0
      %567 = vmatpush.msra.mxu0 0.0
      %568 = vmatpush.msra.mxu0 0.0
      %569 = vmatpush.msra.mxu0 0.0
      %570 = vmatpush.msra.mxu0 0.0
      %571 = vmatpush.msra.mxu0 0.0
      %572 = vmatpush.msra.mxu0 0.0
      %573 = vmatpush.msra.mxu0 0.0
      %574 = vmatpush.msra.mxu0 0.0
      %575 = vmatpush.msra.mxu0 0.0
      %576 = vmatpush.msra.mxu0 0.0
      %577 = vmatpush.msra.mxu0 0.0
      %578 = vmatpush.msra.mxu0 0.0
      %579 = vmatpush.msra.mxu0 %v563
      %580 = vmatpush.msra.mxu0 %v376
      %581 = vmatmul.f32.gmra.mxu0 %v515
      %v582 = vpop.f32.mrf.mxu0
      %v583 = vadd.f32 %v466, %v582
      %584 = vmatmul.f32.gmra.mxu0 %v518
      %v585 = vpop.f32.mrf.mxu0
      %v586 = vadd.f32 %v469, %v585
      %587 = vmatmul.f32.gmra.mxu0 %v521
      %v588 = vpop.f32.mrf.mxu0
      %v589 = vadd.f32 %v472, %v588
      %590 = vmatmul.f32.gmra.mxu0 %v524
      %v591 = vpop.f32.mrf.mxu0
      %v592 = vadd.f32 %v475, %v591
      %593 = vmatmul.f32.gmra.mxu0 %v527
      %v594 = vpop.f32.mrf.mxu0
      %v595 = vadd.f32 %v478, %v594
      %596 = vmatmul.f32.gmra.mxu0 %v530
      %v597 = vpop.f32.mrf.mxu0
      %v598 = vadd.f32 %v481, %v597
      %599 = vmatmul.f32.gmra.mxu0 %v533
      %v600 = vpop.f32.mrf.mxu0
      %v601 = vadd.f32 %v484, %v600
      %602 = vmatmul.f32.gmra.mxu0 %v536
      %v603 = vpop.f32.mrf.mxu0
      %v604 = vadd.f32 %v487, %v603
      %605 = vmatmul.f32.gmra.mxu0 %v539
      %v606 = vpop.f32.mrf.mxu0
      %v607 = vadd.f32 %v490, %v606
      %608 = vmatmul.f32.gmra.mxu0 %v542
      %v609 = vpop.f32.mrf.mxu0
      %v610 = vadd.f32 %v493, %v609
      %611 = vmatmul.f32.gmra.mxu0 %v545
      %v612 = vpop.f32.mrf.mxu0
      %v613 = vadd.f32 %v496, %v612
      %614 = vmatmul.f32.gmra.mxu0 %v548
      %v615 = vpop.f32.mrf.mxu0
      %v616 = vadd.f32 %v499, %v615
      %617 = vmatmul.f32.gmra.mxu0 %v551
      %v618 = vpop.f32.mrf.mxu0
      %v619 = vadd.f32 %v502, %v618
      %620 = vmatmul.f32.gmra.mxu0 %v554
      %v621 = vpop.f32.mrf.mxu0
      %v622 = vadd.f32 %v505, %v621
      %623 = vmatmul.f32.gmra.mxu0 %v557
      %v624 = vpop.f32.mrf.mxu0
      %v625 = vadd.f32 %v508, %v624
      %626 = vmatmul.f32.gmra.mxu0 %v560
      %v627 = vpop.f32.mrf.mxu0
      %v628 = vadd.f32 %v511, %v627
      %629 = vdwg.mxu0
      %v630 = vld [vmem:[%s4] sm:$0x1]
      %v632 = vperm.slane %v630, 0
      %v634 = vadd.f32 %v583, %v632
      %v635 = vadd.f32 %v586, %v632
      %v636 = vadd.f32 %v589, %v632
      %v637 = vadd.f32 %v592, %v632
      %v638 = vadd.f32 %v595, %v632
      %v639 = vadd.f32 %v598, %v632
      %v640 = vadd.f32 %v601, %v632
      %v641 = vadd.f32 %v604, %v632
      %v642 = vadd.f32 %v607, %v632
      %v643 = vadd.f32 %v610, %v632
      %v644 = vadd.f32 %v613, %v632
      %v645 = vadd.f32 %v616, %v632
      %v646 = vadd.f32 %v619, %v632
      %v647 = vadd.f32 %v622, %v632
      %v648 = vadd.f32 %v625, %v632
      %v649 = vadd.f32 %v628, %v632
      %v650 = vtanh.pop %v634
      %v651 = vtanh.pop %v635
      %v652 = vtanh.pop %v636
      %v653 = vtanh.pop %v637
      %v654 = vtanh.pop %v638
      %v655 = vtanh.pop %v639
      %v656 = vtanh.pop %v640
      %v657 = vtanh.pop %v641
      %v658 = vtanh.pop %v642
      %v659 = vtanh.pop %v643
      %v660 = vtanh.pop %v644
      %v661 = vtanh.pop %v645
      %v662 = vtanh.pop %v646
      %v663 = vtanh.pop %v647
      %v664 = vtanh.pop %v648
      %v665 = vtanh.pop %v649
      %v666 = vld [vmem:[%s5] sm:$0xff]
      %v667 = vld [vmem:[%s5 + $0x8] sm:$0xff]
      %v668 = vld [vmem:[%s5 + $0x10] sm:$0xff]
      %v669 = vld [vmem:[%s5 + $0x18] sm:$0xff]
      %v670 = vld [vmem:[%s5 + $0x20] sm:$0xff]
      %v671 = vld [vmem:[%s5 + $0x28] sm:$0xff]
      %v672 = vld [vmem:[%s5 + $0x30] sm:$0xff]
      %v673 = vld [vmem:[%s5 + $0x38] sm:$0xff]
      %v674 = vld [vmem:[%s6] sm:$0x1]
      %v676 = vperm.slane %v674, 0
      %vm678 = vcmask 523264
      %v680 = vsel %vm678, %v650, 0
      %v683 = vsel %vm678, %v651, 0
      %v686 = vsel %vm678, %v652, 0
      %v689 = vsel %vm678, %v653, 0
      %v692 = vsel %vm678, %v654, 0
      %v695 = vsel %vm678, %v655, 0
      %v698 = vsel %vm678, %v656, 0
      %v701 = vsel %vm678, %v657, 0
      %v704 = vsel %vm678, %v658, 0
      %v707 = vsel %vm678, %v659, 0
      %v710 = vsel %vm678, %v660, 0
      %v713 = vsel %vm678, %v661, 0
      %v716 = vsel %vm678, %v662, 0
      %v719 = vsel %vm678, %v663, 0
      %v722 = vsel %vm678, %v664, 0
      %v725 = vsel %vm678, %v665, 0
      %727 = vmatpush.msra.mxu0 0.0
      %728 = vmatpush.msra.mxu0 0.0
      %729 = vmatpush.msra.mxu0 0.0
      %730 = vmatpush.msra.mxu0 0.0
      %731 = vmatpush.msra.mxu0 0.0
      %732 = vmatpush.msra.mxu0 0.0
      %733 = vmatpush.msra.mxu0 0.0
      %734 = vmatpush.msra.mxu0 0.0
      %735 = vmatpush.msra.mxu0 %v673
      %736 = vmatpush.msra.mxu0 %v672
      %737 = vmatpush.msra.mxu0 %v671
      %738 = vmatpush.msra.mxu0 %v670
      %739 = vmatpush.msra.mxu0 %v669
      %740 = vmatpush.msra.mxu0 %v668
      %741 = vmatpush.msra.mxu0 %v667
      %742 = vmatpush.msra.mxu0 %v666
      %743 = vmatmul.f32.gmra.mxu0 %v680
      %v744 = vpop.f32.mrf.mxu0
      %v745 = vadd.f32 %v676, %v744
      %746 = vmatmul.f32.gmra.mxu0 %v683
      %v747 = vpop.f32.mrf.mxu0
      %v748 = vadd.f32 %v676, %v747
      %749 = vmatmul.f32.gmra.mxu0 %v686
      %v750 = vpop.f32.mrf.mxu0
      %v751 = vadd.f32 %v676, %v750
      %752 = vmatmul.f32.gmra.mxu0 %v689
      %v753 = vpop.f32.mrf.mxu0
      %v754 = vadd.f32 %v676, %v753
      %755 = vmatmul.f32.gmra.mxu0 %v692
      %v756 = vpop.f32.mrf.mxu0
      %v757 = vadd.f32 %v676, %v756
      %758 = vmatmul.f32.gmra.mxu0 %v695
      %v759 = vpop.f32.mrf.mxu0
      %v760 = vadd.f32 %v676, %v759
      %761 = vmatmul.f32.gmra.mxu0 %v698
      %v762 = vpop.f32.mrf.mxu0
      %v763 = vadd.f32 %v676, %v762
      %764 = vmatmul.f32.gmra.mxu0 %v701
      %v765 = vpop.f32.mrf.mxu0
      %v766 = vadd.f32 %v676, %v765
      %767 = vmatmul.f32.gmra.mxu0 %v704
      %v768 = vpop.f32.mrf.mxu0
      %v769 = vadd.f32 %v676, %v768
      %770 = vmatmul.f32.gmra.mxu0 %v707
      %v771 = vpop.f32.mrf.mxu0
      %v772 = vadd.f32 %v676, %v771
      %773 = vmatmul.f32.gmra.mxu0 %v710
      %v774 = vpop.f32.mrf.mxu0
      %v775 = vadd.f32 %v676, %v774
      %776 = vmatmul.f32.gmra.mxu0 %v713
      %v777 = vpop.f32.mrf.mxu0
      %v778 = vadd.f32 %v676, %v777
      %779 = vmatmul.f32.gmra.mxu0 %v716
      %v780 = vpop.f32.mrf.mxu0
      %v781 = vadd.f32 %v676, %v780
      %782 = vmatmul.f32.gmra.mxu0 %v719
      %v783 = vpop.f32.mrf.mxu0
      %v784 = vadd.f32 %v676, %v783
      %785 = vmatmul.f32.gmra.mxu0 %v722
      %v786 = vpop.f32.mrf.mxu0
      %v787 = vadd.f32 %v676, %v786
      %788 = vmatmul.f32.gmra.mxu0 %v725
      %v789 = vpop.f32.mrf.mxu0
      %v790 = vadd.f32 %v676, %v789
      %791 = vdwg.mxu0
      %v792 = vtanh.pop %v745
      %v793 = vtanh.pop %v748
      %v794 = vtanh.pop %v751
      %v795 = vtanh.pop %v754
      %v796 = vtanh.pop %v757
      %v797 = vtanh.pop %v760
      %v798 = vtanh.pop %v763
      %v799 = vtanh.pop %v766
      %v800 = vtanh.pop %v769
      %v801 = vtanh.pop %v772
      %v802 = vtanh.pop %v775
      %v803 = vtanh.pop %v778
      %v804 = vtanh.pop %v781
      %v805 = vtanh.pop %v784
      %v806 = vtanh.pop %v787
      %v807 = vtanh.pop %v790
      %v808 = vld [vmem:[%s7] sm:$0x1]
      %v810 = vperm.slane %v808, 0
      %v812 = vmul.f32 %v792, %v810
      %v813 = vmul.f32 %v793, %v810
      %v814 = vmul.f32 %v794, %v810
      %v815 = vmul.f32 %v795, %v810
      %v816 = vmul.f32 %v796, %v810
      %v817 = vmul.f32 %v797, %v810
      %v818 = vmul.f32 %v798, %v810
      %v819 = vmul.f32 %v799, %v810
      %v820 = vmul.f32 %v800, %v810
      %v821 = vmul.f32 %v801, %v810
      %v822 = vmul.f32 %v802, %v810
      %v823 = vmul.f32 %v803, %v810
      %v824 = vmul.f32 %v804, %v810
      %v825 = vmul.f32 %v805, %v810
      %v826 = vmul.f32 %v806, %v810
      %v827 = vmul.f32 %v807, %v810
      %v828 = vsel %vm678, %v812, 0.0
      %829 = vadd.xlane.f32.xlu0 %v828
      %v830 = vpop.xlane.xlu0 %829
      %v831 = vsel %vm678, %v813, 0.0
      %832 = vadd.xlane.f32.xlu0 %v831
      %v833 = vpop.xlane.xlu0 %832
      %v834 = vsel %vm678, %v814, 0.0
      %835 = vadd.xlane.f32.xlu0 %v834
      %v836 = vpop.xlane.xlu0 %835
      %v837 = vsel %vm678, %v815, 0.0
      %838 = vadd.xlane.f32.xlu0 %v837
      %v839 = vpop.xlane.xlu0 %838
      %v840 = vsel %vm678, %v816, 0.0
      %841 = vadd.xlane.f32.xlu0 %v840
      %v842 = vpop.xlane.xlu0 %841
      %v843 = vsel %vm678, %v817, 0.0
      %844 = vadd.xlane.f32.xlu0 %v843
      %v845 = vpop.xlane.xlu0 %844
      %v846 = vsel %vm678, %v818, 0.0
      %847 = vadd.xlane.f32.xlu0 %v846
      %v848 = vpop.xlane.xlu0 %847
      %v849 = vsel %vm678, %v819, 0.0
      %850 = vadd.xlane.f32.xlu0 %v849
      %v851 = vpop.xlane.xlu0 %850
      %v852 = vsel %vm678, %v820, 0.0
      %853 = vadd.xlane.f32.xlu0 %v852
      %v854 = vpop.xlane.xlu0 %853
      %v855 = vsel %vm678, %v821, 0.0
      %856 = vadd.xlane.f32.xlu0 %v855
      %v857 = vpop.xlane.xlu0 %856
      %v858 = vsel %vm678, %v822, 0.0
      %859 = vadd.xlane.f32.xlu0 %v858
      %v860 = vpop.xlane.xlu0 %859
      %v861 = vsel %vm678, %v823, 0.0
      %862 = vadd.xlane.f32.xlu0 %v861
      %v863 = vpop.xlane.xlu0 %862
      %v864 = vsel %vm678, %v824, 0.0
      %865 = vadd.xlane.f32.xlu0 %v864
      %v866 = vpop.xlane.xlu0 %865
      %v867 = vsel %vm678, %v825, 0.0
      %868 = vadd.xlane.f32.xlu0 %v867
      %v869 = vpop.xlane.xlu0 %868
      %v870 = vsel %vm678, %v826, 0.0
      %871 = vadd.xlane.f32.xlu0 %v870
      %v872 = vpop.xlane.xlu0 %871
      %v873 = vsel %vm678, %v827, 0.0
      %874 = vadd.xlane.f32.xlu0 %v873
      %v875 = vpop.xlane.xlu0 %874
      %v876 = vld [vmem:[#allocation2] sm:$0x1]
      %v878 = vperm.slane %v876, 0
      %v880 = vadd.f32 %v830, %v878
      %v881 = vadd.f32 %v833, %v878
      %v882 = vadd.f32 %v836, %v878
      %v883 = vadd.f32 %v839, %v878
      %v884 = vadd.f32 %v842, %v878
      %v885 = vadd.f32 %v845, %v878
      %v886 = vadd.f32 %v848, %v878
      %v887 = vadd.f32 %v851, %v878
      %v888 = vadd.f32 %v854, %v878
      %v889 = vadd.f32 %v857, %v878
      %v890 = vadd.f32 %v860, %v878
      %v891 = vadd.f32 %v863, %v878
      %v892 = vadd.f32 %v866, %v878
      %v893 = vadd.f32 %v869, %v878
      %v894 = vadd.f32 %v872, %v878
      %v895 = vadd.f32 %v875, %v878
      %vm896 = vcmask 7168
      %897 = vst.msk [vmem:[%s358] sm:$0xff] %vm896, %v880
      %898 = vst.msk [vmem:[%s358 + $0x8] sm:$0xff] %vm896, %v881
      %899 = vst.msk [vmem:[%s358 + $0x10] sm:$0xff] %vm896, %v882
      %900 = vst.msk [vmem:[%s358 + $0x18] sm:$0xff] %vm896, %v883
      %901 = vst.msk [vmem:[%s358 + $0x20] sm:$0xff] %vm896, %v884
      %902 = vst.msk [vmem:[%s358 + $0x28] sm:$0xff] %vm896, %v885
      %903 = vst.msk [vmem:[%s358 + $0x30] sm:$0xff] %vm896, %v886
      %904 = vst.msk [vmem:[%s358 + $0x38] sm:$0xff] %vm896, %v887
      %905 = vst.msk [vmem:[%s358 + $0x40] sm:$0xff] %vm896, %v888
      %906 = vst.msk [vmem:[%s358 + $0x48] sm:$0xff] %vm896, %v889
      %907 = vst.msk [vmem:[%s358 + $0x50] sm:$0xff] %vm896, %v890
      %908 = vst.msk [vmem:[%s358 + $0x58] sm:$0xff] %vm896, %v891
      %909 = vst.msk [vmem:[%s358 + $0x60] sm:$0xff] %vm896, %v892
      %910 = vst.msk [vmem:[%s358 + $0x68] sm:$0xff] %vm896, %v893
      %911 = vst.msk [vmem:[%s358 + $0x70] sm:$0xff] %vm896, %v894
      %912 = vst.msk [vmem:[%s358 + $0x78] sm:$0xff] %vm896, %v895
      %s913 = smul.u32 16, %s22
      %p914 = scmp.lt.s32.totalorder %s913, 31
      %s915 = scalar_select %p914, %s913, 31
      %s916 = smul.addr %s915, 8
      %s917 = scalar_lea.vmem %s9, %s916
      // Predicated region
      $region57: #{tpu_custom_call.1} parent=55 // pred_check
        %p918 = pneg %p239
      $region58: #{tpu_custom_call.1} parent=55 // pred_check_branch
        %920 = sbr.rel (%p918) target = $region60
      $region59: #{tpu_custom_call.1} parent=55 // pred_region
        %s921 = smul.u32 16, %s22
      $region60: #{tpu_custom_call.1} parent=55 // pred_fallthru
        _
    $region56: #{tpu_custom_call.1} parent=5 // pred_fallthru
      _
    %p922 = scmp.le.s32.totalorder 2, %s17
    // Predicated region
    $region61: #{tpu_custom_call.1} parent=5 // pred_check
      %p923 = pneg %p922
    $region62: #{tpu_custom_call.1} parent=5 // pred_check_branch
      %925 = sbr.rel (%p923) target = $region64
    $region63: #{tpu_custom_call.1} parent=5 // pred_region
      %s926 = ssub.s32 %s17, 2
      // Predicated region
      $region65: #{tpu_custom_call.1} parent=63 // pred_check
        %p927 = pneg %p245
      $region66: #{tpu_custom_call.1} parent=63 // pred_check_branch
        %929 = sbr.rel (%p927) target = $region68
      $region67: #{tpu_custom_call.1} parent=63 // pred_region
        %s930 = smul.u32 16, %s23
        %p931 = scmp.lt.s32.totalorder %s930, 31
        %s932 = scalar_select %p931, %s930, 31
        %s933 = smul.addr %s932, 8
        %s934 = scalar_lea.vmem %s9, %s933
      $region68: #{tpu_custom_call.1} parent=63 // pred_fallthru
        _
    $region64: #{tpu_custom_call.1} parent=5 // pred_fallthru
      _
  $region6: #{tpu_custom_call.1} parent=0 // loop_footer
    %s21 = sadd.s32 1, %s17
  $region7: #{tpu_custom_call.1} parent=0 // loop_footer_branch
    %16 = sbr.rel target = $region3
  $region8: #{tpu_custom_call.1} parent=0 // loop_exit
    _

</llo_original>
